<compile_context>
chip_gen: v7x
topology: tpu7x:2x2x1
jax: 0.10.0
libtpu: 0.0.40
codegen_flags: <defaults>
</compile_context>

<pallas_src>
import jax
import jax.numpy as jnp
from jax.experimental import pallas as pl
from jax.experimental.pallas import tpu as pltpu


def _se_block_kernel(x_ref, w1_ref, w2_ref, o_ref):
    # x_ref / o_ref: (TB, C, L) in the input dtype; w1_ref: (Cr, C); w2_ref: (C, Cr)
    x = x_ref[...]
    L = x.shape[2]

    # Squeeze: f32-accumulating mean over the spatial (lane) axis, computed
    # directly on the native-dtype tile (no full-tile f32 materialization).
    y = jnp.sum(x, axis=2, dtype=jnp.float32) * jnp.float32(1.0 / L)     # (TB, C)

    # Excitation: Linear(C -> Cr) -> ReLU -> Linear(Cr -> C) -> Sigmoid, in f32.
    w1 = w1_ref[...].astype(jnp.float32)                                 # (Cr, C)
    w2 = w2_ref[...].astype(jnp.float32)                                 # (C, Cr)
    # y @ w1^T and h @ w2^T expressed as dot_general (contract dim 1 of both
    # operands) so no explicit transpose is materialized.
    h = jax.lax.dot_general(y, w1, (((1,), (1,)), ((), ())),
                            preferred_element_type=jnp.float32)          # (TB, Cr)
    h = jnp.maximum(h, 0.0)
    z = jax.lax.dot_general(h, w2, (((1,), (1,)), ((), ())),
                            preferred_element_type=jnp.float32)          # (TB, C)
    s = jax.nn.sigmoid(z)                                                # EUP

    # Scale: apply the per-(batch, channel) gate in the input's native dtype.
    o_ref[...] = x * s.astype(x.dtype)[:, :, None]


def _vmem_budget():
    """(x_block_budget_bytes, vmem_cap_bytes), tuned per TPU generation."""
    small_vmem = True  # conservative default (v7x-like: 64 MiB physical VMEM)
    try:
        info = pltpu.get_tpu_info()
        cap = int(getattr(info, "vmem_capacity_bytes", 0) or 0)
        if cap > 0:
            small_vmem = cap <= 64 * 2**20
    except Exception:
        pass
    if small_vmem:
        return 5 * 2**20, 48 * 2**20    # v7x: keep the whole VMEM plan <= ~48 MiB
    return 8 * 2**20, 96 * 2**20        # v5e / v6e: 128 MiB physical VMEM


def _auto_block_b(B, bytes_per_row, x_block_budget):
    block_b = max(1, x_block_budget // max(bytes_per_row, 1))
    block_b = max(block_b, 8)           # fill sublanes in the excitation matmuls
    block_b = min(block_b, B)
    nsteps = -(-B // block_b)
    if nsteps == 1:
        # Split even a single-step grid in two when B is big enough so both
        # v7x TensorCores get work on this purely bandwidth-bound kernel.
        if B >= 16:
            block_b = -(-B // 2)
    elif nsteps % 2 == 1:
        # Round the grid length up to an even number of steps for megacore balance.
        block_b = max(min(B, 8), -(-B // (nsteps + 1)))
    return block_b


def se_block(x, w1, w2, *, block_b=None):
    """x: (B, C, L); w1: (C//r, C); w2: (C, C//r). Returns (B, C, L)."""
    B, C, L = x.shape
    Cr = w1.shape[0]
    assert w1.shape == (Cr, C), (w1.shape, (Cr, C))
    assert w2.shape == (C, Cr), (w2.shape, (C, Cr))

    itemsize = jnp.dtype(x.dtype).itemsize
    bytes_per_row = C * L * itemsize
    x_block_budget, vmem_cap = _vmem_budget()

    if block_b is None:
        block_b = _auto_block_b(B, bytes_per_row, x_block_budget)
    block_b = max(1, min(block_b, B))

    # VMEM plan: double-buffered input + output tiles, resident weights, plus
    # small f32 temporaries and headroom; never exceed the per-generation cap.
    plan = 4 * block_b * bytes_per_row + 2 * (w1.nbytes + w2.nbytes) + (1 << 20)
    vmem_limit = int(min(vmem_cap, max(32 * 2**20, plan + 8 * 2**20)))

    grid = (pl.cdiv(B, block_b),)

    return pl.pallas_call(
        _se_block_kernel,
        out_shape=jax.ShapeDtypeStruct((B, C, L), x.dtype),
        grid_spec=pltpu.PrefetchScalarGridSpec(
            num_scalar_prefetch=0,
            grid=grid,
            in_specs=[
                pl.BlockSpec((block_b, C, L), lambda i: (i, 0, 0)),
                pl.BlockSpec((Cr, C), lambda i: (0, 0)),   # resident weight
                pl.BlockSpec((C, Cr), lambda i: (0, 0)),   # resident weight
            ],
            out_specs=pl.BlockSpec((block_b, C, L), lambda i: (i, 0, 0)),
        ),
        compiler_params=pltpu.CompilerParams(
            dimension_semantics=("parallel",),
            vmem_limit_bytes=vmem_limit,
        ),
    )(x, w1, w2)


def se_block_ref(x, w1, w2):
    # Pure-JAX reference matching the PyTorch SEBlock forward.
    xf = x.astype(jnp.float32)
    y = jnp.mean(xf, axis=2)                              # (B, C)
    h = jnp.maximum(y @ w1.astype(jnp.float32).T, 0.0)
    s = jax.nn.sigmoid(h @ w2.astype(jnp.float32).T)
    return (xf * s[:, :, None]).astype(x.dtype)


if __name__ == "__main__":
    key = jax.random.PRNGKey(0)
    kx, k1, k2 = jax.random.split(key, 3)

    # Small shapes consistent with the module: channel=64, reduction=16 -> Cr=4.
    B, C, L = 8, 64, 128
    reduction = 16
    Cr = C // reduction

    x = jax.random.normal(kx, (B, C, L), dtype=jnp.float32)
    w1 = jax.random.normal(k1, (Cr, C), dtype=jnp.float32) * 0.1   # Linear(C -> Cr)
    w2 = jax.random.normal(k2, (C, Cr), dtype=jnp.float32) * 0.1   # Linear(Cr -> C)

    # block_b=4 -> a 2-step grid: exercises pipelining and megacore sharding.
    out = se_block(x, w1, w2, block_b=4)
    out = jax.block_until_ready(out)

    ref = se_block_ref(x, w1, w2)
    assert out.shape == ref.shape, (out.shape, ref.shape)
    assert jnp.allclose(out, ref, rtol=1e-5, atol=1e-5), (
        float(jnp.max(jnp.abs(out - ref))))
    print("KERNEL_OK")
</pallas_src>

<mosaic_0001>
module attributes {stable_mosaic.version = 11 : i64} {
  func.func @_se_block_kernel(%arg0: i32, %arg1: memref<4x64x128xf32, #tpu.memory_space<vmem>>, %arg2: memref<4x64xf32, #tpu.memory_space<vmem>>, %arg3: memref<64x4xf32, #tpu.memory_space<vmem>>, %arg4: memref<4x64x128xf32, #tpu.memory_space<vmem>>) attributes {dimension_semantics = [#tpu.dimension_semantics<parallel>], iteration_bounds = array<i64: 2>, scalar_prefetch = 0 : i64, scratch_operands = 0 : i64, tpu.core_type = #tpu.core_type<tc>, window_params = [{transform_indices = @transform_0, window_bounds = array<i64: 4, 64, 128>}, {pipeline_mode = #tpu.pipeline_mode<synchronous>, transform_indices = @transform_1, window_bounds = array<i64: 4, 64>}, {pipeline_mode = #tpu.pipeline_mode<synchronous>, transform_indices = @transform_2, window_bounds = array<i64: 64, 4>}, {transform_indices = @transform_3, window_bounds = array<i64: 4, 64, 128>}]} {
    %c0 = arith.constant 0 : index
    %c0_0 = arith.constant 0 : index
    %c0_1 = arith.constant 0 : index
    %0 = vector.load %arg1[%c0, %c0_0, %c0_1] : memref<4x64x128xf32, #tpu.memory_space<vmem>>, vector<4x64x128xf32>
    %cst = arith.constant dense<0.000000e+00> : vector<4x64xf32>
    %1 = vector.multi_reduction <add>, %0, %cst [2] : vector<4x64x128xf32> to vector<4x64xf32>
    %cst_2 = arith.constant 7.812500e-03 : f32
    %2 = vector.broadcast %cst_2 : f32 to vector<4x64xf32>
    %3 = arith.mulf %1, %2 : vector<4x64xf32>
    %c0_3 = arith.constant 0 : index
    %c0_4 = arith.constant 0 : index
    %4 = vector.load %arg2[%c0_3, %c0_4] : memref<4x64xf32, #tpu.memory_space<vmem>>, vector<4x64xf32>
    %c0_5 = arith.constant 0 : index
    %c0_6 = arith.constant 0 : index
    %5 = vector.load %arg3[%c0_5, %c0_6] : memref<64x4xf32, #tpu.memory_space<vmem>>, vector<64x4xf32>
    %cst_7 = arith.constant dense<0.000000e+00> : vector<4x4xf32>
    %6 = tpu.matmul %3, %4, %cst_7 {dimension_numbers = #tpu.dot_dimension_numbers<[1], [1], [0], [0], [0, 0, 1, 0], [], []>} : vector<4x64xf32>, vector<4x64xf32>, vector<4x4xf32> -> vector<4x4xf32>
    %cst_8 = arith.constant 0.000000e+00 : f32
    %7 = vector.broadcast %cst_8 : f32 to vector<4x4xf32>
    %8 = arith.maximumf %6, %7 : vector<4x4xf32>
    %cst_9 = arith.constant dense<0.000000e+00> : vector<4x64xf32>
    %9 = tpu.matmul %8, %5, %cst_9 {dimension_numbers = #tpu.dot_dimension_numbers<[1], [1], [0], [0], [0, 0, 1, 0], [], []>} : vector<4x4xf32>, vector<64x4xf32>, vector<4x64xf32> -> vector<4x64xf32>
    %10 = arith.negf %9 : vector<4x64xf32>
    %11 = math.exp %10 : vector<4x64xf32>
    %cst_10 = arith.constant 1.000000e+00 : f32
    %12 = vector.broadcast %cst_10 : f32 to vector<4x64xf32>
    %13 = arith.addf %12, %11 : vector<4x64xf32>
    %14 = arith.divf %12, %13 : vector<4x64xf32>
    %15 = vector.shape_cast %14 : vector<4x64xf32> to vector<4x64x1xf32>
    %16 = vector.broadcast %15 : vector<4x64x1xf32> to vector<4x64x128xf32>
    %17 = arith.mulf %0, %16 : vector<4x64x128xf32>
    %c0_11 = arith.constant 0 : index
    %c0_12 = arith.constant 0 : index
    %c0_13 = arith.constant 0 : index
    %18 = vector.load %arg4[%c0_11, %c0_12, %c0_13] : memref<4x64x128xf32, #tpu.memory_space<vmem>>, vector<4x64x128xf32>
    tpu.vector_store %arg4[%c0_11, %c0_12, %c0_13], %17 {strides = array<i32>} : memref<4x64x128xf32, #tpu.memory_space<vmem>>, vector<4x64x128xf32>,
    return
  }
  func.func @transform_0(%arg0: i32) -> (i32, i32, i32) {
    %c0_i32 = arith.constant 0 : i32
    %c0_i32_0 = arith.constant 0 : i32
    %c0_i32_1 = arith.constant 0 : i32
    return %arg0, %c0_i32, %c0_i32_0 : i32, i32, i32
  }
  func.func @transform_1(%arg0: i32) -> (i32, i32) {
    %c0_i32 = arith.constant 0 : i32
    %c0_i32_0 = arith.constant 0 : i32
    %c0_i32_1 = arith.constant 0 : i32
    return %c0_i32, %c0_i32_0 : i32, i32
  }
  func.func @transform_2(%arg0: i32) -> (i32, i32) {
    %c0_i32 = arith.constant 0 : i32
    %c0_i32_0 = arith.constant 0 : i32
    %c0_i32_1 = arith.constant 0 : i32
    return %c0_i32, %c0_i32_0 : i32, i32
  }
  func.func @transform_3(%arg0: i32) -> (i32, i32, i32) {
    %c0_i32 = arith.constant 0 : i32
    %c0_i32_0 = arith.constant 0 : i32
    %c0_i32_1 = arith.constant 0 : i32
    return %arg0, %c0_i32, %c0_i32_0 : i32, i32, i32
  }
}

</mosaic_0001>

<llo_original>
// kernel: tpu_custom_call.1
$region0: #{tpu_custom_call.1}
  #allocation0 [shape = 'u32[]', space=smem, size = 0x4, offset = 0x4, fixed_abs, tag = 'smem constant byte address 0x4 - core index']
  #allocation1 [shape = 'u32[144,128]{1,0:T(1,128)}', space=vmem, size = 0x12000, scoped, tag = 'internal scratch']
  %s0 = inlined_call_operand.hbm [shape: f32[8,64,128], index: 0, kind: input, shape index: {}]
  %s1 = inlined_call_operand.vmem [shape: f32[4,64], index: 1, kind: input, shape index: {}]
  %s2 = inlined_call_operand.vmem [shape: f32[64,4], index: 2, kind: input, shape index: {}]
  %s3 = inlined_call_operand.hbm [shape: f32[8,64,128], index: 3, kind: output, shape index: {}]
  %s4 = sld [smem:[#allocation0]]
  $region49: #{tpu_custom_call.1} parent=0
    _
  %s6 = ssub.s32 1, %s4
  %s7 = scalar_select 0, %s6, %s4
  $region1: #{tpu_custom_call.1} parent=0
    #allocation2 [shape = 'u8[262144]{0}', space=vmem, size = 0x40000, scoped, tag = 'input window, operand 0']
    #allocation3 [shape = 's32[2]{0}', space=sflag, size = 0x8, scoped, tag = 'scoped memory for tpu_custom_call.1']
    #allocation4 [shape = 's32[2]{0}', space=sflag, size = 0x8, scoped, tag = 'scoped memory for tpu_custom_call.1']
    #allocation5 [shape = 'u8[262144]{0}', space=vmem, size = 0x40000, scoped, tag = 'output window, operand 0']
    %8 = vsyncpa [#allocation3], 0
    %s9 = scalar_lea.sflag [#allocation3], 1
    %10 = vsyncpa %s9, 0
    %11 = vsyncpa [#allocation4], 0
    %s12 = scalar_lea.sflag [#allocation4], 1
    %13 = vsyncpa %s12, 0
    loop: start=0, step=1, limit=4
    $region2: #{tpu_custom_call.1} parent=1 // loop_pre_header
      _
    $region3: #{tpu_custom_call.1} parent=1 // loop_header
      %s15 = sphi 0, %s19
      %p16 = scmp.ge.s32.totalorder %s15, 4
      %s25 = sphi 0, %s27
      %s28 = sphi 0, %s25
      %s29 = sphi 0, %s28
      %s45 = sphi 0, %s29
      %s49 = sphi 0, %s49
      %s51 = sphi 0, %s49
      %s52 = sphi 0, %s51
      %s66 = sphi 0, %s52
      %s70 = sphi 0, %s70
      %s72 = sphi 0, %s70
      %s73 = sphi 0, %s72
      %s87 = sphi 0, %s73
      %s93 = sphi 0, %s95
      %s96 = sphi 0, %s93
      %s97 = sphi 0, %s96
      %s113 = sphi 0, %s97
    $region4: #{tpu_custom_call.1} parent=1 // loop_header_branch
      %18 = sbr.rel (%p16) target = $region8
    $region5: #{tpu_custom_call.1} parent=1 // loop_body
      %s20 = ssub.s32 %s15, 1
      %s21 = ssub.s32 %s15, 2
      %s22 = sadd.s32 %s15, 1
      %s23 = ssub.s32 %s15, %s22
      %p24 = scmp.eq.s32.totalorder %s23, 0
      %s26 = sadd.s32 %s25, 1
      %s27 = scalar_select %p24, %s25, %s26
      %p30 = pneg %p24
      %p31 = scmp.eq.s32.totalorder %s15, 1
      %p32 = por %p30, %p31
      %p33 = scmp.ne.s32.totalorder %s25, %s28
      %p34 = scmp.eq.s32.totalorder %s15, 0
      %p35 = por %p33, %p34
      %p36 = scmp.ne.s32.totalorder %s25, %s28
      %p37 = scmp.eq.s32.totalorder %s20, 1
      %p38 = por %p36, %p37
      %p39 = scmp.ne.s32.totalorder %s28, %s29
      %p40 = scmp.eq.s32.totalorder %s20, 0
      %p41 = por %p39, %p40
      %p42 = scmp.ne.s32.totalorder %s28, %s29
      %p43 = scmp.eq.s32.totalorder %s21, 1
      %p44 = por %p42, %p43
      %p46 = scmp.ne.s32.totalorder %s29, %s45
      %p47 = scmp.eq.s32.totalorder %s21, 0
      %p48 = por %p46, %p47
      %s50 = sadd.s32 %s49, 1
      %p53 = scmp.eq.s32.totalorder %s15, 1
      %p54 = scmp.ne.s32.totalorder %s49, %s51
      %p55 = scmp.eq.s32.totalorder %s15, 0
      %p56 = por %p54, %p55
      %p57 = scmp.ne.s32.totalorder %s49, %s51
      %p58 = scmp.eq.s32.totalorder %s20, 1
      %p59 = por %p57, %p58
      %p60 = scmp.ne.s32.totalorder %s51, %s52
      %p61 = scmp.eq.s32.totalorder %s20, 0
      %p62 = por %p60, %p61
      %p63 = scmp.ne.s32.totalorder %s51, %s52
      %p64 = scmp.eq.s32.totalorder %s21, 1
      %p65 = por %p63, %p64
      %p67 = scmp.ne.s32.totalorder %s52, %s66
      %p68 = scmp.eq.s32.totalorder %s21, 0
      %p69 = por %p67, %p68
      %s71 = sadd.s32 %s70, 1
      %p74 = scmp.eq.s32.totalorder %s15, 1
      %p75 = scmp.ne.s32.totalorder %s70, %s72
      %p76 = scmp.eq.s32.totalorder %s15, 0
      %p77 = por %p75, %p76
      %p78 = scmp.ne.s32.totalorder %s70, %s72
      %p79 = scmp.eq.s32.totalorder %s20, 1
      %p80 = por %p78, %p79
      %p81 = scmp.ne.s32.totalorder %s72, %s73
      %p82 = scmp.eq.s32.totalorder %s20, 0
      %p83 = por %p81, %p82
      %p84 = scmp.ne.s32.totalorder %s72, %s73
      %p85 = scmp.eq.s32.totalorder %s21, 1
      %p86 = por %p84, %p85
      %p88 = scmp.ne.s32.totalorder %s73, %s87
      %p89 = scmp.eq.s32.totalorder %s21, 0
      %p90 = por %p88, %p89
      %s91 = ssub.s32 %s15, %s22
      %p92 = scmp.eq.s32.totalorder %s91, 0
      %s94 = sadd.s32 %s93, 1
      %s95 = scalar_select %p92, %s93, %s94
      %p98 = pneg %p92
      %p99 = scmp.eq.s32.totalorder %s15, 1
      %p100 = por %p98, %p99
      %p101 = scmp.ne.s32.totalorder %s93, %s96
      %p102 = scmp.eq.s32.totalorder %s15, 0
      %p103 = por %p101, %p102
      %p104 = scmp.ne.s32.totalorder %s93, %s96
      %p105 = scmp.eq.s32.totalorder %s20, 1
      %p106 = por %p104, %p105
      %p107 = scmp.ne.s32.totalorder %s96, %s97
      %p108 = scmp.eq.s32.totalorder %s20, 0
      %p109 = por %p107, %p108
      %p110 = scmp.ne.s32.totalorder %s96, %s97
      %p111 = scmp.eq.s32.totalorder %s21, 1
      %p112 = por %p110, %p111
      %p114 = scmp.ne.s32.totalorder %s97, %s113
      %p115 = scmp.eq.s32.totalorder %s21, 0
      %p116 = por %p114, %p115
      %p117 = scmp.le.s32.totalorder 1, %s15
      %p118 = scmp.lt.s32.totalorder %s15, 3
      %p119 = pnand %p117, %p118
      %p120 = pneg %p119
      // Predicated region
      $region9: #{tpu_custom_call.1} parent=5 // pred_check
        _
      $region10: #{tpu_custom_call.1} parent=5 // pred_check_branch
        %122 = sbr.rel (%p119) target = $region12
      $region11: #{tpu_custom_call.1} parent=5 // pred_region
        %s123 = ssub.s32 %s15, 1
        // Predicated region
        $region13: #{tpu_custom_call.1} parent=11 // pred_check
          %p124 = pneg %p62
        $region14: #{tpu_custom_call.1} parent=11 // pred_check_branch
          %126 = sbr.rel (%p124) target = $region16
        $region15: #{tpu_custom_call.1} parent=11 // pred_region
          _
        $region16: #{tpu_custom_call.1} parent=11 // pred_fallthru
          _
        // Predicated region
        $region17: #{tpu_custom_call.1} parent=11 // pred_check
          %p127 = pneg %p83
        $region18: #{tpu_custom_call.1} parent=11 // pred_check_branch
          %129 = sbr.rel (%p127) target = $region20
        $region19: #{tpu_custom_call.1} parent=11 // pred_region
          _
        $region20: #{tpu_custom_call.1} parent=11 // pred_fallthru
          _
      $region12: #{tpu_custom_call.1} parent=5 // pred_fallthru
        _
      %p130 = scmp.lt.s32.totalorder %s15, 2
      // Predicated region
      $region21: #{tpu_custom_call.1} parent=5 // pred_check
        %p131 = pneg %p130
      $region22: #{tpu_custom_call.1} parent=5 // pred_check_branch
        %133 = sbr.rel (%p131) target = $region24
      $region23: #{tpu_custom_call.1} parent=5 // pred_region
        // Predicated region
        $region25: #{tpu_custom_call.1} parent=23 // pred_check
          %p134 = pneg %p35
        $region26: #{tpu_custom_call.1} parent=23 // pred_check_branch
          %136 = sbr.rel (%p134) target = $region28
        $region27: #{tpu_custom_call.1} parent=23 // pred_region
          %s137 = sand.u32 %s25, 1
          %s138 = scalar_lea.sflag [#allocation3], %s137
          %s139 = sand.u32 %s25, 1
          %s140 = smul.addr %s139, 256
          %s141 = scalar_lea.vmem [#allocation2], %s140
          %s142 = smul.u32 4, %s15
          %s144 = ssub.s32 4096, 4096
          %145 = vsyncadd %s138, %s144
          %s146 = smul.addr %s142, 8
          %s147 = smul.addr %s146, 128
          %s148 = scalar_lea.hbm %s0, %s147
          %s149 = sshll.u32 %s141, 4
          %s150 = int_to_ptr.vmem [resolvable:$true] %s149
          %155 = dma.hbm_to_vmem [thread:$0]  %s148, 4096, %s150, %s138, 128, 128, 8
        $region28: #{tpu_custom_call.1} parent=23 // pred_fallthru
          _
      $region24: #{tpu_custom_call.1} parent=5 // pred_fallthru
        _
      %p156 = scmp.le.s32.totalorder 1, %s15
      %p157 = scmp.lt.s32.totalorder %s15, 3
      %p158 = pnand %p156, %p157
      %p159 = pneg %p158
      // Predicated region
      $region29: #{tpu_custom_call.1} parent=5 // pred_check
        _
      $region30: #{tpu_custom_call.1} parent=5 // pred_check_branch
        %161 = sbr.rel (%p158) target = $region32
      $region31: #{tpu_custom_call.1} parent=5 // pred_region
        %s162 = ssub.s32 %s15, 1
        %s163 = sand.u32 %s28, 1
        %s164 = scalar_lea.sflag [#allocation3], %s163
        %s165 = sand.u32 %s28, 1
        %s166 = smul.addr %s165, 256
        %s167 = scalar_lea.vmem [#allocation2], %s166
        // Predicated region
        $region33: #{tpu_custom_call.1} parent=31 // pred_check
          %p168 = pneg %p41
        $region34: #{tpu_custom_call.1} parent=31 // pred_check_branch
          %170 = sbr.rel (%p168) target = $region36
        $region35: #{tpu_custom_call.1} parent=31 // pred_region
          %171 = dma.done %s164, 4096
        $region36: #{tpu_custom_call.1} parent=31 // pred_fallthru
          _
        %s172 = sand.u32 %s28, 1
        %s173 = scalar_lea.sflag [#allocation3], %s172
        %s174 = sand.u32 %s28, 1
        %s175 = smul.addr %s174, 256
        %s176 = scalar_lea.vmem [#allocation2], %s175
        %p177 = pneg %p41
        %p178 = pneg %p38
        %p179 = pneg %p62
        %p180 = pneg %p59
        %p181 = pneg %p83
        %p182 = pneg %p80
        %p183 = pneg %p109
        %p184 = pneg %p106
        %s185 = sand.u32 %s96, 1
        %s186 = scalar_lea.sflag [#allocation4], %s185
        %s187 = sand.u32 %s96, 1
        %s188 = smul.addr %s187, 256
        %s189 = scalar_lea.vmem [#allocation5], %s188
        %s190 = smul.u32 4, %s20
        %s191 = smul.u32 4, %s20
        %v192 = vld [vmem:[%s167] sm:$0xff]
        %v193 = vld [vmem:[%s167 + $0x8] sm:$0xff]
        %v194 = vld [vmem:[%s167 + $0x10] sm:$0xff]
        %v195 = vld [vmem:[%s167 + $0x18] sm:$0xff]
        %v196 = vld [vmem:[%s167 + $0x20] sm:$0xff]
        %v197 = vld [vmem:[%s167 + $0x28] sm:$0xff]
        %v198 = vld [vmem:[%s167 + $0x30] sm:$0xff]
        %v199 = vld [vmem:[%s167 + $0x38] sm:$0xff]
        %v200 = vld [vmem:[%s167 + $0x40] sm:$0xff]
        %v201 = vld [vmem:[%s167 + $0x48] sm:$0xff]
        %v202 = vld [vmem:[%s167 + $0x50] sm:$0xff]
        %v203 = vld [vmem:[%s167 + $0x58] sm:$0xff]
        %v204 = vld [vmem:[%s167 + $0x60] sm:$0xff]
        %v205 = vld [vmem:[%s167 + $0x68] sm:$0xff]
        %v206 = vld [vmem:[%s167 + $0x70] sm:$0xff]
        %v207 = vld [vmem:[%s167 + $0x78] sm:$0xff]
        %v208 = vld [vmem:[%s167 + $0x80] sm:$0xff]
        %v209 = vld [vmem:[%s167 + $0x88] sm:$0xff]
        %v210 = vld [vmem:[%s167 + $0x90] sm:$0xff]
        %v211 = vld [vmem:[%s167 + $0x98] sm:$0xff]
        %v212 = vld [vmem:[%s167 + $0xa0] sm:$0xff]
        %v213 = vld [vmem:[%s167 + $0xa8] sm:$0xff]
        %v214 = vld [vmem:[%s167 + $0xb0] sm:$0xff]
        %v215 = vld [vmem:[%s167 + $0xb8] sm:$0xff]
        %v216 = vld [vmem:[%s167 + $0xc0] sm:$0xff]
        %v217 = vld [vmem:[%s167 + $0xc8] sm:$0xff]
        %v218 = vld [vmem:[%s167 + $0xd0] sm:$0xff]
        %v219 = vld [vmem:[%s167 + $0xd8] sm:$0xff]
        %v220 = vld [vmem:[%s167 + $0xe0] sm:$0xff]
        %v221 = vld [vmem:[%s167 + $0xe8] sm:$0xff]
        %v222 = vld [vmem:[%s167 + $0xf0] sm:$0xff]
        %v223 = vld [vmem:[%s167 + $0xf8] sm:$0xff]
        %224 = vadd.xlane.f32.xlu0 %v192
        %v225 = vpop.xlane.xlu0 %224
        %226 = vadd.xlane.f32.xlu0 %v193
        %v227 = vpop.xlane.xlu0 %226
        %228 = vadd.xlane.f32.xlu0 %v194
        %v229 = vpop.xlane.xlu0 %228
        %230 = vadd.xlane.f32.xlu0 %v195
        %v231 = vpop.xlane.xlu0 %230
        %232 = vadd.xlane.f32.xlu0 %v196
        %v233 = vpop.xlane.xlu0 %232
        %234 = vadd.xlane.f32.xlu0 %v197
        %v235 = vpop.xlane.xlu0 %234
        %236 = vadd.xlane.f32.xlu0 %v198
        %v237 = vpop.xlane.xlu0 %236
        %238 = vadd.xlane.f32.xlu0 %v199
        %v239 = vpop.xlane.xlu0 %238
        %240 = vadd.xlane.f32.xlu0 %v200
        %v241 = vpop.xlane.xlu0 %240
        %242 = vadd.xlane.f32.xlu0 %v201
        %v243 = vpop.xlane.xlu0 %242
        %244 = vadd.xlane.f32.xlu0 %v202
        %v245 = vpop.xlane.xlu0 %244
        %246 = vadd.xlane.f32.xlu0 %v203
        %v247 = vpop.xlane.xlu0 %246
        %248 = vadd.xlane.f32.xlu0 %v204
        %v249 = vpop.xlane.xlu0 %248
        %250 = vadd.xlane.f32.xlu0 %v205
        %v251 = vpop.xlane.xlu0 %250
        %252 = vadd.xlane.f32.xlu0 %v206
        %v253 = vpop.xlane.xlu0 %252
        %254 = vadd.xlane.f32.xlu0 %v207
        %v255 = vpop.xlane.xlu0 %254
        %256 = vadd.xlane.f32.xlu0 %v208
        %v257 = vpop.xlane.xlu0 %256
        %258 = vadd.xlane.f32.xlu0 %v209
        %v259 = vpop.xlane.xlu0 %258
        %260 = vadd.xlane.f32.xlu0 %v210
        %v261 = vpop.xlane.xlu0 %260
        %262 = vadd.xlane.f32.xlu0 %v211
        %v263 = vpop.xlane.xlu0 %262
        %264 = vadd.xlane.f32.xlu0 %v212
        %v265 = vpop.xlane.xlu0 %264
        %266 = vadd.xlane.f32.xlu0 %v213
        %v267 = vpop.xlane.xlu0 %266
        %268 = vadd.xlane.f32.xlu0 %v214
        %v269 = vpop.xlane.xlu0 %268
        %270 = vadd.xlane.f32.xlu0 %v215
        %v271 = vpop.xlane.xlu0 %270
        %272 = vadd.xlane.f32.xlu0 %v216
        %v273 = vpop.xlane.xlu0 %272
        %274 = vadd.xlane.f32.xlu0 %v217
        %v275 = vpop.xlane.xlu0 %274
        %276 = vadd.xlane.f32.xlu0 %v218
        %v277 = vpop.xlane.xlu0 %276
        %278 = vadd.xlane.f32.xlu0 %v219
        %v279 = vpop.xlane.xlu0 %278
        %280 = vadd.xlane.f32.xlu0 %v220
        %v281 = vpop.xlane.xlu0 %280
        %282 = vadd.xlane.f32.xlu0 %v221
        %v283 = vpop.xlane.xlu0 %282
        %284 = vadd.xlane.f32.xlu0 %v222
        %v285 = vpop.xlane.xlu0 %284
        %286 = vadd.xlane.f32.xlu0 %v223
        %v287 = vpop.xlane.xlu0 %286
        %v288 = vmul.f32 %v225, 0.0078125
        %v289 = vmul.f32 %v227, 0.0078125
        %v290 = vmul.f32 %v229, 0.0078125
        %v291 = vmul.f32 %v231, 0.0078125
        %v292 = vmul.f32 %v233, 0.0078125
        %v293 = vmul.f32 %v235, 0.0078125
        %v294 = vmul.f32 %v237, 0.0078125
        %v295 = vmul.f32 %v239, 0.0078125
        %v296 = vmul.f32 %v241, 0.0078125
        %v297 = vmul.f32 %v243, 0.0078125
        %v298 = vmul.f32 %v245, 0.0078125
        %v299 = vmul.f32 %v247, 0.0078125
        %v300 = vmul.f32 %v249, 0.0078125
        %v301 = vmul.f32 %v251, 0.0078125
        %v302 = vmul.f32 %v253, 0.0078125
        %v303 = vmul.f32 %v255, 0.0078125
        %v304 = vmul.f32 %v257, 0.0078125
        %v305 = vmul.f32 %v259, 0.0078125
        %v306 = vmul.f32 %v261, 0.0078125
        %v307 = vmul.f32 %v263, 0.0078125
        %v308 = vmul.f32 %v265, 0.0078125
        %v309 = vmul.f32 %v267, 0.0078125
        %v310 = vmul.f32 %v269, 0.0078125
        %v311 = vmul.f32 %v271, 0.0078125
        %v312 = vmul.f32 %v273, 0.0078125
        %v313 = vmul.f32 %v275, 0.0078125
        %v314 = vmul.f32 %v277, 0.0078125
        %v315 = vmul.f32 %v279, 0.0078125
        %v316 = vmul.f32 %v281, 0.0078125
        %v317 = vmul.f32 %v283, 0.0078125
        %v318 = vmul.f32 %v285, 0.0078125
        %v319 = vmul.f32 %v287, 0.0078125
        %v320 = vld [vmem:[%s1] sm:$0xf]
        %v321 = vld [vmem:[%s2] sm:$0xff]
        %v322 = vld [vmem:[%s2 + $0x8] sm:$0xff]
        %v323 = vld [vmem:[%s2 + $0x10] sm:$0xff]
        %v324 = vld [vmem:[%s2 + $0x18] sm:$0xff]
        %v325 = vld [vmem:[%s2 + $0x20] sm:$0xff]
        %v326 = vld [vmem:[%s2 + $0x28] sm:$0xff]
        %v327 = vld [vmem:[%s2 + $0x30] sm:$0xff]
        %v328 = vld [vmem:[%s2 + $0x38] sm:$0xff]
        %v361 = vlaneseq
        %v362 = vand.u32 %v361, 127
        %v363 = vlaneseq
        %v364 = vshrl.u32 %v363, 7
        %v365 = vsub.s32 %v362, %v364
        %v366 = vrot.slane %v288, %v365
        %v367 = vadd.s32 %v362, 4294967288
        %v368 = vlaneseq
        %v369 = vshrl.u32 %v368, 7
        %v370 = vsub.s32 %v367, %v369
        %v371 = vrot.slane %v289, %v370
        %vm372 = vcmask 130112
        %v373 = vsel %vm372, %v371, %v366
        %v374 = vadd.s32 %v362, 4294967280
        %v375 = vlaneseq
        %v376 = vshrl.u32 %v375, 7
        %v377 = vsub.s32 %v374, %v376
        %v378 = vrot.slane %v290, %v377
        %vm379 = vcmask 195712
        %v380 = vsel %vm379, %v378, %v373
        %v381 = vadd.s32 %v362, 4294967272
        %v382 = vlaneseq
        %v383 = vshrl.u32 %v382, 7
        %v384 = vsub.s32 %v381, %v383
        %v385 = vrot.slane %v291, %v384
        %vm386 = vcmask 261312
        %v387 = vsel %vm386, %v385, %v380
        %v388 = vadd.s32 %v362, 4294967264
        %v389 = vlaneseq
        %v390 = vshrl.u32 %v389, 7
        %v391 = vsub.s32 %v388, %v390
        %v392 = vrot.slane %v292, %v391
        %vm393 = vcmask 326912
        %v394 = vsel %vm393, %v392, %v387
        %v395 = vadd.s32 %v362, 4294967256
        %v396 = vlaneseq
        %v397 = vshrl.u32 %v396, 7
        %v398 = vsub.s32 %v395, %v397
        %v399 = vrot.slane %v293, %v398
        %vm400 = vcmask 392512
        %v401 = vsel %vm400, %v399, %v394
        %v402 = vadd.s32 %v362, 4294967248
        %v403 = vlaneseq
        %v404 = vshrl.u32 %v403, 7
        %v405 = vsub.s32 %v402, %v404
        %v406 = vrot.slane %v294, %v405
        %vm407 = vcmask 458112
        %v408 = vsel %vm407, %v406, %v401
        %v409 = vadd.s32 %v362, 4294967240
        %v410 = vlaneseq
        %v411 = vshrl.u32 %v410, 7
        %v412 = vsub.s32 %v409, %v411
        %v413 = vrot.slane %v295, %v412
        %vm414 = vcmask 523712
        %v415 = vsel %vm414, %v413, %v408
        %v416 = vlaneseq
        %v417 = vshrl.u32 %v416, 7
        %v418 = vsub.s32 %v362, %v417
        %v419 = vrot.slane %v296, %v418
        %v420 = vlaneseq
        %v421 = vshrl.u32 %v420, 7
        %v422 = vsub.s32 %v367, %v421
        %v423 = vrot.slane %v297, %v422
        %v424 = vsel %vm372, %v423, %v419
        %v425 = vlaneseq
        %v426 = vshrl.u32 %v425, 7
        %v427 = vsub.s32 %v374, %v426
        %v428 = vrot.slane %v298, %v427
        %v429 = vsel %vm379, %v428, %v424
        %v430 = vlaneseq
        %v431 = vshrl.u32 %v430, 7
        %v432 = vsub.s32 %v381, %v431
        %v433 = vrot.slane %v299, %v432
        %v434 = vsel %vm386, %v433, %v429
        %v435 = vlaneseq
        %v436 = vshrl.u32 %v435, 7
        %v437 = vsub.s32 %v388, %v436
        %v438 = vrot.slane %v300, %v437
        %v439 = vsel %vm393, %v438, %v434
        %v440 = vlaneseq
        %v441 = vshrl.u32 %v440, 7
        %v442 = vsub.s32 %v395, %v441
        %v443 = vrot.slane %v301, %v442
        %v444 = vsel %vm400, %v443, %v439
        %v445 = vlaneseq
        %v446 = vshrl.u32 %v445, 7
        %v447 = vsub.s32 %v402, %v446
        %v448 = vrot.slane %v302, %v447
        %v449 = vsel %vm407, %v448, %v444
        %v450 = vlaneseq
        %v451 = vshrl.u32 %v450, 7
        %v452 = vsub.s32 %v409, %v451
        %v453 = vrot.slane %v303, %v452
        %v454 = vsel %vm414, %v453, %v449
        %v455 = vlaneseq
        %v456 = vshrl.u32 %v455, 7
        %v457 = vsub.s32 %v362, %v456
        %v458 = vrot.slane %v304, %v457
        %v459 = vlaneseq
        %v460 = vshrl.u32 %v459, 7
        %v461 = vsub.s32 %v367, %v460
        %v462 = vrot.slane %v305, %v461
        %v463 = vsel %vm372, %v462, %v458
        %v464 = vlaneseq
        %v465 = vshrl.u32 %v464, 7
        %v466 = vsub.s32 %v374, %v465
        %v467 = vrot.slane %v306, %v466
        %v468 = vsel %vm379, %v467, %v463
        %v469 = vlaneseq
        %v470 = vshrl.u32 %v469, 7
        %v471 = vsub.s32 %v381, %v470
        %v472 = vrot.slane %v307, %v471
        %v473 = vsel %vm386, %v472, %v468
        %v474 = vlaneseq
        %v475 = vshrl.u32 %v474, 7
        %v476 = vsub.s32 %v388, %v475
        %v477 = vrot.slane %v308, %v476
        %v478 = vsel %vm393, %v477, %v473
        %v479 = vlaneseq
        %v480 = vshrl.u32 %v479, 7
        %v481 = vsub.s32 %v395, %v480
        %v482 = vrot.slane %v309, %v481
        %v483 = vsel %vm400, %v482, %v478
        %v484 = vlaneseq
        %v485 = vshrl.u32 %v484, 7
        %v486 = vsub.s32 %v402, %v485
        %v487 = vrot.slane %v310, %v486
        %v488 = vsel %vm407, %v487, %v483
        %v489 = vlaneseq
        %v490 = vshrl.u32 %v489, 7
        %v491 = vsub.s32 %v409, %v490
        %v492 = vrot.slane %v311, %v491
        %v493 = vsel %vm414, %v492, %v488
        %v494 = vlaneseq
        %v495 = vshrl.u32 %v494, 7
        %v496 = vsub.s32 %v362, %v495
        %v497 = vrot.slane %v312, %v496
        %v498 = vlaneseq
        %v499 = vshrl.u32 %v498, 7
        %v500 = vsub.s32 %v367, %v499
        %v501 = vrot.slane %v313, %v500
        %v502 = vsel %vm372, %v501, %v497
        %v503 = vlaneseq
        %v504 = vshrl.u32 %v503, 7
        %v505 = vsub.s32 %v374, %v504
        %v506 = vrot.slane %v314, %v505
        %v507 = vsel %vm379, %v506, %v502
        %v508 = vlaneseq
        %v509 = vshrl.u32 %v508, 7
        %v510 = vsub.s32 %v381, %v509
        %v511 = vrot.slane %v315, %v510
        %v512 = vsel %vm386, %v511, %v507
        %v513 = vlaneseq
        %v514 = vshrl.u32 %v513, 7
        %v515 = vsub.s32 %v388, %v514
        %v516 = vrot.slane %v316, %v515
        %v517 = vsel %vm393, %v516, %v512
        %v518 = vlaneseq
        %v519 = vshrl.u32 %v518, 7
        %v520 = vsub.s32 %v395, %v519
        %v521 = vrot.slane %v317, %v520
        %v522 = vsel %vm400, %v521, %v517
        %v523 = vlaneseq
        %v524 = vshrl.u32 %v523, 7
        %v525 = vsub.s32 %v402, %v524
        %v526 = vrot.slane %v318, %v525
        %v527 = vsel %vm407, %v526, %v522
        %v528 = vlaneseq
        %v529 = vshrl.u32 %v528, 7
        %v530 = vsub.s32 %v409, %v529
        %v531 = vrot.slane %v319, %v530
        %v532 = vsel %vm414, %v531, %v527
        %vm533 = vcmask 1041409
        %v534 = vsel %vm533, %v454, %v415
        %vm535 = vcmask 1042434
        %v536 = vsel %vm535, %v493, %v534
        %vm537 = vcmask 1043459
        %v538 = vsel %vm537, %v532, %v536
        %vm539 = vcmask 523264
        %v540 = vsel %vm539, %v538, 0
        %v543 = vsel %vm539, %v320, 0
        %545 = vmatprep.subr.mxu0 0.0
        %546 = vmatpush1.xpose.msra.mxu0 %v543
        %547 = vmatprep.subr.mxu0 0.0
        %548 = vmatpush1.xpose.msra.mxu0 0.0
        %549 = vmatprep.subr.mxu0 0.0
        %550 = vmatpush1.xpose.msra.mxu0 0.0
        %551 = vmatprep.subr.mxu0 0.0
        %552 = vmatpush1.xpose.msra.mxu0 0.0
        %553 = vmatprep.subr.mxu0 0.0
        %554 = vmatpush1.xpose.msra.mxu0 0.0
        %555 = vmatprep.subr.mxu0 0.0
        %556 = vmatpush1.xpose.msra.mxu0 0.0
        %557 = vmatprep.subr.mxu0 0.0
        %558 = vmatpush1.xpose.msra.mxu0 0.0
        %559 = vmatprep.subr.mxu0 0.0
        %560 = vmatpush1.xpose.msra.mxu0 0.0
        %561 = vmatprep.subr.mxu0 0.0
        %562 = vmatpush1.xpose.msra.mxu0 0.0
        %563 = vmatprep.subr.mxu0 0.0
        %564 = vmatpush1.xpose.msra.mxu0 0.0
        %565 = vmatprep.subr.mxu0 0.0
        %566 = vmatpush1.xpose.msra.mxu0 0.0
        %567 = vmatprep.subr.mxu0 0.0
        %568 = vmatpush1.xpose.msra.mxu0 0.0
        %569 = vmatprep.subr.mxu0 0.0
        %570 = vmatpush1.xpose.msra.mxu0 0.0
        %571 = vmatprep.subr.mxu0 0.0
        %572 = vmatpush1.xpose.msra.mxu0 0.0
        %573 = vmatprep.subr.mxu0 0.0
        %574 = vmatpush1.xpose.msra.mxu0 0.0
        %575 = vmatprep.subr.mxu0 0.0
        %576 = vmatpush1.xpose.msra.mxu0 0.0
        %577 = vmatprep.subr.mxu0 0.0
        %578 = vmatpush1.xpose.msra.mxu0 0.0
        %579 = vmatprep.subr.mxu0 0.0
        %580 = vmatpush1.xpose.msra.mxu0 0.0
        %581 = vmatprep.subr.mxu0 0.0
        %582 = vmatpush1.xpose.msra.mxu0 0.0
        %583 = vmatprep.subr.mxu0 0.0
        %584 = vmatpush1.xpose.msra.mxu0 0.0
        %585 = vmatprep.subr.mxu0 0.0
        %586 = vmatpush1.xpose.msra.mxu0 0.0
        %587 = vmatprep.subr.mxu0 0.0
        %588 = vmatpush1.xpose.msra.mxu0 0.0
        %589 = vmatprep.subr.mxu0 0.0
        %590 = vmatpush1.xpose.msra.mxu0 0.0
        %591 = vmatprep.subr.mxu0 0.0
        %592 = vmatpush1.xpose.msra.mxu0 0.0
        %593 = vmatprep.subr.mxu0 0.0
        %594 = vmatpush1.xpose.msra.mxu0 0.0
        %595 = vmatprep.subr.mxu0 0.0
        %596 = vmatpush1.xpose.msra.mxu0 0.0
        %597 = vmatprep.subr.mxu0 0.0
        %598 = vmatpush1.xpose.msra.mxu0 0.0
        %599 = vmatprep.subr.mxu0 0.0
        %600 = vmatpush1.xpose.msra.mxu0 0.0
        %601 = vmatprep.subr.mxu0 0.0
        %602 = vmatpush1.xpose.msra.mxu0 0.0
        %603 = vmatprep.subr.mxu0 0.0
        %604 = vmatpush1.xpose.msra.mxu0 0.0
        %605 = vmatprep.subr.mxu0 0.0
        %606 = vmatpush1.xpose.msra.mxu0 0.0
        %607 = vmatprep.subr.mxu0 0.0
        %608 = vmatpush1.xpose.msra.mxu0 0.0
        %609 = vmatprep.mubr.f32.mxu0 0.0
        %610 = vmatmul.mubr.f32.gmra.mrb[0].mxu0 %v540
        %v611 = vpop.f32.mrb[0].mxu0
        %v612 = vadd.f32 0.0, %v611
        %v613 = vpop.f32.mrb[0].mxu0
        %614 = vdwg.mxu0
        %v615 = vmax.f32 %v612, 0.0
        %vm616 = vcmask 31744
        %v618 = vsel %vm616, %v615, 0
        %v621 = vsel %vm616, %v321, 0
        %v624 = vsel %vm616, %v322, 0
        %v627 = vsel %vm616, %v323, 0
        %v630 = vsel %vm616, %v324, 0
        %v633 = vsel %vm616, %v325, 0
        %v636 = vsel %vm616, %v326, 0
        %v639 = vsel %vm616, %v327, 0
        %v642 = vsel %vm616, %v328, 0
        %644 = vmatprep.subr.mxu0 0.0
        %645 = vmatpush1.xpose.msra.mxu0 %v621
        %646 = vmatprep.subr.mxu0 0.0
        %647 = vmatpush1.xpose.msra.mxu0 %v624
        %648 = vmatprep.subr.mxu0 0.0
        %649 = vmatpush1.xpose.msra.mxu0 %v627
        %650 = vmatprep.subr.mxu0 0.0
        %651 = vmatpush1.xpose.msra.mxu0 %v630
        %652 = vmatprep.subr.mxu0 0.0
        %653 = vmatpush1.xpose.msra.mxu0 %v633
        %654 = vmatprep.subr.mxu0 0.0
        %655 = vmatpush1.xpose.msra.mxu0 %v636
        %656 = vmatprep.subr.mxu0 0.0
        %657 = vmatpush1.xpose.msra.mxu0 %v639
        %658 = vmatprep.subr.mxu0 0.0
        %659 = vmatpush1.xpose.msra.mxu0 %v642
        %660 = vmatprep.subr.mxu0 0.0
        %661 = vmatpush1.xpose.msra.mxu0 0.0
        %662 = vmatprep.subr.mxu0 0.0
        %663 = vmatpush1.xpose.msra.mxu0 0.0
        %664 = vmatprep.subr.mxu0 0.0
        %665 = vmatpush1.xpose.msra.mxu0 0.0
        %666 = vmatprep.subr.mxu0 0.0
        %667 = vmatpush1.xpose.msra.mxu0 0.0
        %668 = vmatprep.subr.mxu0 0.0
        %669 = vmatpush1.xpose.msra.mxu0 0.0
        %670 = vmatprep.subr.mxu0 0.0
        %671 = vmatpush1.xpose.msra.mxu0 0.0
        %672 = vmatprep.subr.mxu0 0.0
        %673 = vmatpush1.xpose.msra.mxu0 0.0
        %674 = vmatprep.subr.mxu0 0.0
        %675 = vmatpush1.xpose.msra.mxu0 0.0
        %676 = vmatprep.subr.mxu0 0.0
        %677 = vmatpush1.xpose.msra.mxu0 0.0
        %678 = vmatprep.subr.mxu0 0.0
        %679 = vmatpush1.xpose.msra.mxu0 0.0
        %680 = vmatprep.subr.mxu0 0.0
        %681 = vmatpush1.xpose.msra.mxu0 0.0
        %682 = vmatprep.subr.mxu0 0.0
        %683 = vmatpush1.xpose.msra.mxu0 0.0
        %684 = vmatprep.subr.mxu0 0.0
        %685 = vmatpush1.xpose.msra.mxu0 0.0
        %686 = vmatprep.subr.mxu0 0.0
        %687 = vmatpush1.xpose.msra.mxu0 0.0
        %688 = vmatprep.subr.mxu0 0.0
        %689 = vmatpush1.xpose.msra.mxu0 0.0
        %690 = vmatprep.subr.mxu0 0.0
        %691 = vmatpush1.xpose.msra.mxu0 0.0
        %692 = vmatprep.subr.mxu0 0.0
        %693 = vmatpush1.xpose.msra.mxu0 0.0
        %694 = vmatprep.subr.mxu0 0.0
        %695 = vmatpush1.xpose.msra.mxu0 0.0
        %696 = vmatprep.subr.mxu0 0.0
        %697 = vmatpush1.xpose.msra.mxu0 0.0
        %698 = vmatprep.subr.mxu0 0.0
        %699 = vmatpush1.xpose.msra.mxu0 0.0
        %700 = vmatprep.subr.mxu0 0.0
        %701 = vmatpush1.xpose.msra.mxu0 0.0
        %702 = vmatprep.subr.mxu0 0.0
        %703 = vmatpush1.xpose.msra.mxu0 0.0
        %704 = vmatprep.subr.mxu0 0.0
        %705 = vmatpush1.xpose.msra.mxu0 0.0
        %706 = vmatprep.subr.mxu0 0.0
        %707 = vmatpush1.xpose.msra.mxu0 0.0
        %708 = vmatprep.mubr.f32.mxu0 0.0
        %709 = vmatmul.mubr.f32.gmra.mrb[0].mxu0 %v618
        %v710 = vpop.f32.mrb[0].mxu0
        %v711 = vadd.f32 0.0, %v710
        %v712 = vpop.f32.mrb[0].mxu0
        %713 = vdwg.mxu0
        %v714 = vxor.u32 %v711, 2147483648
        %v715 = vmul.f32 %v714, 1.442695
        %v716 = vpow.pop %v715
        %v717 = vadd.f32 %v716, 1.0
        %v718 = vrcp.pop %v717
        %v719 = vmul.f32 1.0, %v718
        %v720 = vlaneseq
        %v721 = vshrl.u32 %v720, 7
        %v722 = vsub.s32 0, %v721
        %v723 = vrot.slane %v719, %v722
        %725 = vbcast.lane.b32.xlu0 %v723, 256
        %v726 = vpop.permute.xlu0 %725
        %s728 = sor.u32 256, 8
        %729 = vbcast.lane.b32.xlu0 %v723, %s728
        %v730 = vpop.permute.xlu0 %729
        %s732 = sor.u32 256, 16
        %733 = vbcast.lane.b32.xlu0 %v723, %s732
        %v734 = vpop.permute.xlu0 %733
        %s736 = sor.u32 256, 24
        %737 = vbcast.lane.b32.xlu0 %v723, %s736
        %v738 = vpop.permute.xlu0 %737
        %s740 = sor.u32 256, 32
        %741 = vbcast.lane.b32.xlu0 %v723, %s740
        %v742 = vpop.permute.xlu0 %741
        %s744 = sor.u32 256, 40
        %745 = vbcast.lane.b32.xlu0 %v723, %s744
        %v746 = vpop.permute.xlu0 %745
        %s748 = sor.u32 256, 48
        %749 = vbcast.lane.b32.xlu0 %v723, %s748
        %v750 = vpop.permute.xlu0 %749
        %s752 = sor.u32 256, 56
        %753 = vbcast.lane.b32.xlu0 %v723, %s752
        %v754 = vpop.permute.xlu0 %753
        %v755 = vlaneseq
        %v756 = vshrl.u32 %v755, 7
        %v757 = vsub.s32 1, %v756
        %v758 = vrot.slane %v719, %v757
        %760 = vbcast.lane.b32.xlu0 %v758, 256
        %v761 = vpop.permute.xlu0 %760
        %s763 = sor.u32 256, 8
        %764 = vbcast.lane.b32.xlu0 %v758, %s763
        %v765 = vpop.permute.xlu0 %764
        %s767 = sor.u32 256, 16
        %768 = vbcast.lane.b32.xlu0 %v758, %s767
        %v769 = vpop.permute.xlu0 %768
        %s771 = sor.u32 256, 24
        %772 = vbcast.lane.b32.xlu0 %v758, %s771
        %v773 = vpop.permute.xlu0 %772
        %s775 = sor.u32 256, 32
        %776 = vbcast.lane.b32.xlu0 %v758, %s775
        %v777 = vpop.permute.xlu0 %776
        %s779 = sor.u32 256, 40
        %780 = vbcast.lane.b32.xlu0 %v758, %s779
        %v781 = vpop.permute.xlu0 %780
        %s783 = sor.u32 256, 48
        %784 = vbcast.lane.b32.xlu0 %v758, %s783
        %v785 = vpop.permute.xlu0 %784
        %s787 = sor.u32 256, 56
        %788 = vbcast.lane.b32.xlu0 %v758, %s787
        %v789 = vpop.permute.xlu0 %788
        %v790 = vlaneseq
        %v791 = vshrl.u32 %v790, 7
        %v792 = vsub.s32 2, %v791
        %v793 = vrot.slane %v719, %v792
        %795 = vbcast.lane.b32.xlu0 %v793, 256
        %v796 = vpop.permute.xlu0 %795
        %s798 = sor.u32 256, 8
        %799 = vbcast.lane.b32.xlu0 %v793, %s798
        %v800 = vpop.permute.xlu0 %799
        %s802 = sor.u32 256, 16
        %803 = vbcast.lane.b32.xlu0 %v793, %s802
        %v804 = vpop.permute.xlu0 %803
        %s806 = sor.u32 256, 24
        %807 = vbcast.lane.b32.xlu0 %v793, %s806
        %v808 = vpop.permute.xlu0 %807
        %s810 = sor.u32 256, 32
        %811 = vbcast.lane.b32.xlu0 %v793, %s810
        %v812 = vpop.permute.xlu0 %811
        %s814 = sor.u32 256, 40
        %815 = vbcast.lane.b32.xlu0 %v793, %s814
        %v816 = vpop.permute.xlu0 %815
        %s818 = sor.u32 256, 48
        %819 = vbcast.lane.b32.xlu0 %v793, %s818
        %v820 = vpop.permute.xlu0 %819
        %s822 = sor.u32 256, 56
        %823 = vbcast.lane.b32.xlu0 %v793, %s822
        %v824 = vpop.permute.xlu0 %823
        %v825 = vlaneseq
        %v826 = vshrl.u32 %v825, 7
        %v827 = vsub.s32 3, %v826
        %v828 = vrot.slane %v719, %v827
        %830 = vbcast.lane.b32.xlu0 %v828, 256
        %v831 = vpop.permute.xlu0 %830
        %s833 = sor.u32 256, 8
        %834 = vbcast.lane.b32.xlu0 %v828, %s833
        %v835 = vpop.permute.xlu0 %834
        %s837 = sor.u32 256, 16
        %838 = vbcast.lane.b32.xlu0 %v828, %s837
        %v839 = vpop.permute.xlu0 %838
        %s841 = sor.u32 256, 24
        %842 = vbcast.lane.b32.xlu0 %v828, %s841
        %v843 = vpop.permute.xlu0 %842
        %s845 = sor.u32 256, 32
        %846 = vbcast.lane.b32.xlu0 %v828, %s845
        %v847 = vpop.permute.xlu0 %846
        %s849 = sor.u32 256, 40
        %850 = vbcast.lane.b32.xlu0 %v828, %s849
        %v851 = vpop.permute.xlu0 %850
        %s853 = sor.u32 256, 48
        %854 = vbcast.lane.b32.xlu0 %v828, %s853
        %v855 = vpop.permute.xlu0 %854
        %s857 = sor.u32 256, 56
        %858 = vbcast.lane.b32.xlu0 %v828, %s857
        %v859 = vpop.permute.xlu0 %858
        %v860 = vmul.f32 %v192, %v726
        %v861 = vmul.f32 %v193, %v730
        %v862 = vmul.f32 %v194, %v734
        %v863 = vmul.f32 %v195, %v738
        %v864 = vmul.f32 %v196, %v742
        %v865 = vmul.f32 %v197, %v746
        %v866 = vmul.f32 %v198, %v750
        %v867 = vmul.f32 %v199, %v754
        %v868 = vmul.f32 %v200, %v761
        %v869 = vmul.f32 %v201, %v765
        %v870 = vmul.f32 %v202, %v769
        %v871 = vmul.f32 %v203, %v773
        %v872 = vmul.f32 %v204, %v777
        %v873 = vmul.f32 %v205, %v781
        %v874 = vmul.f32 %v206, %v785
        %v875 = vmul.f32 %v207, %v789
        %v876 = vmul.f32 %v208, %v796
        %v877 = vmul.f32 %v209, %v800
        %v878 = vmul.f32 %v210, %v804
        %v879 = vmul.f32 %v211, %v808
        %v880 = vmul.f32 %v212, %v812
        %v881 = vmul.f32 %v213, %v816
        %v882 = vmul.f32 %v214, %v820
        %v883 = vmul.f32 %v215, %v824
        %v884 = vmul.f32 %v216, %v831
        %v885 = vmul.f32 %v217, %v835
        %v886 = vmul.f32 %v218, %v839
        %v887 = vmul.f32 %v219, %v843
        %v888 = vmul.f32 %v220, %v847
        %v889 = vmul.f32 %v221, %v851
        %v890 = vmul.f32 %v222, %v855
        %v891 = vmul.f32 %v223, %v859
        %892 = vst [vmem:[%s189] sm:$0xff] %v860
        %893 = vst [vmem:[%s189 + $0x8] sm:$0xff] %v861
        %894 = vst [vmem:[%s189 + $0x10] sm:$0xff] %v862
        %895 = vst [vmem:[%s189 + $0x18] sm:$0xff] %v863
        %896 = vst [vmem:[%s189 + $0x20] sm:$0xff] %v864
        %897 = vst [vmem:[%s189 + $0x28] sm:$0xff] %v865
        %898 = vst [vmem:[%s189 + $0x30] sm:$0xff] %v866
        %899 = vst [vmem:[%s189 + $0x38] sm:$0xff] %v867
        %900 = vst [vmem:[%s189 + $0x40] sm:$0xff] %v868
        %901 = vst [vmem:[%s189 + $0x48] sm:$0xff] %v869
        %902 = vst [vmem:[%s189 + $0x50] sm:$0xff] %v870
        %903 = vst [vmem:[%s189 + $0x58] sm:$0xff] %v871
        %904 = vst [vmem:[%s189 + $0x60] sm:$0xff] %v872
        %905 = vst [vmem:[%s189 + $0x68] sm:$0xff] %v873
        %906 = vst [vmem:[%s189 + $0x70] sm:$0xff] %v874
        %907 = vst [vmem:[%s189 + $0x78] sm:$0xff] %v875
        %908 = vst [vmem:[%s189 + $0x80] sm:$0xff] %v876
        %909 = vst [vmem:[%s189 + $0x88] sm:$0xff] %v877
        %910 = vst [vmem:[%s189 + $0x90] sm:$0xff] %v878
        %911 = vst [vmem:[%s189 + $0x98] sm:$0xff] %v879
        %912 = vst [vmem:[%s189 + $0xa0] sm:$0xff] %v880
        %913 = vst [vmem:[%s189 + $0xa8] sm:$0xff] %v881
        %914 = vst [vmem:[%s189 + $0xb0] sm:$0xff] %v882
        %915 = vst [vmem:[%s189 + $0xb8] sm:$0xff] %v883
        %916 = vst [vmem:[%s189 + $0xc0] sm:$0xff] %v884
        %917 = vst [vmem:[%s189 + $0xc8] sm:$0xff] %v885
        %918 = vst [vmem:[%s189 + $0xd0] sm:$0xff] %v886
        %919 = vst [vmem:[%s189 + $0xd8] sm:$0xff] %v887
        %920 = vst [vmem:[%s189 + $0xe0] sm:$0xff] %v888
        %921 = vst [vmem:[%s189 + $0xe8] sm:$0xff] %v889
        %922 = vst [vmem:[%s189 + $0xf0] sm:$0xff] %v890
        %923 = vst [vmem:[%s189 + $0xf8] sm:$0xff] %v891
        %s924 = sand.u32 %s96, 1
        %s925 = scalar_lea.sflag [#allocation4], %s924
        %s926 = sand.u32 %s96, 1
        %s927 = smul.addr %s926, 256
        %s928 = scalar_lea.vmem [#allocation5], %s927
        // Predicated region
        $region37: #{tpu_custom_call.1} parent=31 // pred_check
          %p929 = pneg %p106
        $region38: #{tpu_custom_call.1} parent=31 // pred_check_branch
          %931 = sbr.rel (%p929) target = $region40
        $region39: #{tpu_custom_call.1} parent=31 // pred_region
          %s932 = smul.u32 4, %s20
          %s934 = ssub.s32 4096, 4096
          %935 = vsyncadd %s925, %s934
          %s936 = smul.addr %s932, 8
          %s937 = smul.addr %s936, 128
          %s938 = scalar_lea.hbm %s3, %s937
          %s939 = sshll.u32 %s928, 4
          %s940 = int_to_ptr.vmem [resolvable:$true] %s939
          %945 = dma.vmem_to_hbm [thread:$0]  %s940, 4096, %s938, %s925, 128, 128, 8
        $region40: #{tpu_custom_call.1} parent=31 // pred_fallthru
          _
      $region32: #{tpu_custom_call.1} parent=5 // pred_fallthru
        _
      %p946 = scmp.le.s32.totalorder 2, %s15
      // Predicated region
      $region41: #{tpu_custom_call.1} parent=5 // pred_check
        %p947 = pneg %p946
      $region42: #{tpu_custom_call.1} parent=5 // pred_check_branch
        %949 = sbr.rel (%p947) target = $region44
      $region43: #{tpu_custom_call.1} parent=5 // pred_region
        %s950 = ssub.s32 %s15, 2
        // Predicated region
        $region45: #{tpu_custom_call.1} parent=43 // pred_check
          %p951 = pneg %p112
        $region46: #{tpu_custom_call.1} parent=43 // pred_check_branch
          %953 = sbr.rel (%p951) target = $region48
        $region47: #{tpu_custom_call.1} parent=43 // pred_region
          %s954 = sand.u32 %s97, 1
          %s955 = scalar_lea.sflag [#allocation4], %s954
          %s956 = sand.u32 %s97, 1
          %s957 = smul.addr %s956, 256
          %s958 = scalar_lea.vmem [#allocation5], %s957
          %959 = dma.done %s955, 4096
        $region48: #{tpu_custom_call.1} parent=43 // pred_fallthru
          _
      $region44: #{tpu_custom_call.1} parent=5 // pred_fallthru
        _
    $region6: #{tpu_custom_call.1} parent=1 // loop_footer
      %s19 = sadd.s32 1, %s15
    $region7: #{tpu_custom_call.1} parent=1 // loop_footer_branch
      %14 = sbr.rel target = $region3
    $region8: #{tpu_custom_call.1} parent=1 // loop_exit
      _
    %960 = vsyncpa [#allocation3], 1
    %s961 = scalar_lea.sflag [#allocation3], 1
    %962 = vsyncpa %s961, 1
    %963 = vsyncpa [#allocation4], 1
    %s964 = scalar_lea.sflag [#allocation4], 1
    %965 = vsyncpa %s964, 1

</llo_original>
